<compile_context>
chip_gen: v5e
topology: v5e:2x2
jax: 0.10.0
libtpu: 0.0.40
codegen_flags: <defaults>
</compile_context>

<pallas_src>
import numpy as np
import jax
import jax.numpy as jnp
from jax.experimental import pallas as pl
from jax.experimental.pallas import tpu as pltpu

BN_EPS = 1e-5


# --------------------------------- kernel -----------------------------------
def hbd_kernel(x_ref, w_ref, b_ref, o_ref):
    # x_ref: (Cin, T) f32 | w_ref: (Cout, Cin) bf16 | b_ref: (Cout, 1) f32
    # o_ref: (Cout, T) f32    (channels on sublanes, pixels on lanes)
    x_bf = x_ref[...].astype(jnp.bfloat16)        # in-kernel cast (VPU slack)
    acc = jnp.dot(w_ref[...], x_bf, preferred_element_type=jnp.float32)
    acc = acc + b_ref[...]                        # bias broadcast along lanes
    o_ref[...] = jnp.maximum(acc, 0.0).astype(o_ref.dtype)


# -------------------------------- tiling -------------------------------------
def _pick_tile(p_pad, cin, cout, vmem_budget_bytes):
    """Largest lane tile (multiple of 128, dividing p_pad) whose double-buffered
    f32 x-block + f32 out-block fit the VMEM budget."""
    per_pixel = 2 * (cin * 4 + cout * 4)          # 2 buffers, f32 in + f32 out
    max_tile = max(128, (vmem_budget_bytes // per_pixel) // 128 * 128)
    m = p_pad // 128
    d_cap = max(1, min(m, max_tile // 128))
    for d in range(d_cap, 0, -1):
        if m % d == 0:
            return d * 128
    return 128


# -------------------------------- wrapper ------------------------------------
def hbd_pallas(x_nchw, w_folded, b_folded, *, vmem_budget_bytes=16 << 20):
    N, Cin, H, W = x_nchw.shape
    Cout = w_folded.shape[0]
    P = H * W

    # Free reshape only -- no transpose, no extra HBM pass.
    x3d = x_nchw.reshape(N, Cin, P)

    # Keep the lane axis a multiple of 128 so every store is unmasked.
    P_pad = pl.cdiv(P, 128) * 128
    if P_pad != P:
        x3d = jnp.pad(x3d, ((0, 0), (0, 0), (0, P_pad - P)))

    w_bf = w_folded.astype(jnp.bfloat16)
    b = b_folded.reshape(Cout, 1).astype(jnp.float32)

    tile = _pick_tile(P_pad, Cin, Cout, vmem_budget_bytes)
    n_tiles = P_pad // tile

    cost = pl.CostEstimate(
        flops=2 * N * P_pad * Cin * Cout + 2 * N * P_pad * Cout,
        transcendentals=0,
        bytes_accessed=x3d.size * 4 + w_bf.size * 2 + b.size * 4
        + N * Cout * P_pad * 4,
    )

    # TODO(synk): when H*W per image is small (<~32K pixels), blocking several
    # images per grid step (or pipeline_mode=pl.Buffered(3) on x) would further
    # amortize the ~0.35us per-step overhead.
    out3d = pl.pallas_call(
        hbd_kernel,
        out_shape=jax.ShapeDtypeStruct((N, Cout, P_pad), jnp.float32),
        grid_spec=pltpu.PrefetchScalarGridSpec(
            num_scalar_prefetch=0,
            grid=(N, n_tiles),
            in_specs=[
                pl.BlockSpec((pl.Squeezed(), Cin, tile), lambda n, i: (n, 0, i)),
                pl.BlockSpec((Cout, Cin), lambda n, i: (0, 0)),
                pl.BlockSpec((Cout, 1), lambda n, i: (0, 0)),
            ],
            out_specs=pl.BlockSpec((pl.Squeezed(), Cout, tile),
                                   lambda n, i: (n, 0, i)),
        ),
        compiler_params=pltpu.CompilerParams(
            dimension_semantics=("parallel", "parallel"),
            vmem_limit_bytes=32 * 1024 * 1024,
        ),
        cost_estimate=cost,
    )(x3d, w_bf, b)

    if P_pad != P:
        out3d = out3d[:, :, :P]
    return out3d.reshape(N, Cout, H, W)


# --------------------------- parameter construction --------------------------
def fold_bn(w, gamma, beta, running_mean, running_var, eps=BN_EPS):
    """Fold inference-mode BatchNorm2d into the preceding 1x1 conv (bias=False)."""
    scale = gamma / jnp.sqrt(running_var + eps)
    w_folded = w * scale[:, None]
    b_folded = beta - running_mean * scale
    return w_folded, b_folded


# ------------------------------ pure-JAX reference ---------------------------
def hbd_reference(x_nchw, w, gamma, beta, running_mean, running_var, eps=BN_EPS):
    conv = jnp.einsum('oc,nchw->nohw', w, x_nchw)
    scale = gamma / jnp.sqrt(running_var + eps)
    shift = beta - running_mean * scale
    bn = conv * scale[None, :, None, None] + shift[None, :, None, None]
    return jnp.maximum(bn, 0.0)


# ----------------------------------- main ------------------------------------
if __name__ == "__main__":
    N, Cin, H, W = 2, 4, 16, 16
    Cout = 8

    key = jax.random.PRNGKey(0)
    kx, kw, kg, kb, km, kv = jax.random.split(key, 6)
    x = jax.random.normal(kx, (N, Cin, H, W), jnp.float32)
    w = jax.random.normal(kw, (Cout, Cin), jnp.float32) * 0.1
    gamma = jax.random.uniform(kg, (Cout,), jnp.float32, 0.5, 1.5)
    beta = jax.random.normal(kb, (Cout,), jnp.float32) * 0.05
    running_mean = jax.random.normal(km, (Cout,), jnp.float32) * 0.05
    running_var = jax.random.uniform(kv, (Cout,), jnp.float32, 0.5, 1.5)

    w_folded, b_folded = fold_bn(w, gamma, beta, running_mean, running_var)

    out = jax.block_until_ready(hbd_pallas(x, w_folded, b_folded))
    ref = jax.block_until_ready(
        hbd_reference(x, w, gamma, beta, running_mean, running_var))

    assert out.shape == (N, Cout, H, W)
    # bf16 MXU inputs with f32 accumulation -> documented loosened tolerance.
    np.testing.assert_allclose(np.asarray(out), np.asarray(ref),
                               rtol=2e-2, atol=2e-2)
    print("KERNEL_OK")
</pallas_src>

<mosaic_0001>
module attributes {stable_mosaic.version = 11 : i64} {
  func.func @hbd_kernel(%arg0: i32, %arg1: i32, %arg2: memref<1x4x256xf32, #tpu.memory_space<vmem>>, %arg3: memref<8x4xbf16, #tpu.memory_space<vmem>>, %arg4: memref<8x1xf32, #tpu.memory_space<vmem>>, %arg5: memref<1x8x256xf32, #tpu.memory_space<vmem>>) attributes {dimension_semantics = [#tpu.dimension_semantics<parallel>, #tpu.dimension_semantics<parallel>], iteration_bounds = array<i64: 2, 1>, scalar_prefetch = 0 : i64, scratch_operands = 0 : i64, tpu.core_type = #tpu.core_type<tc>, window_params = [{transform_indices = @transform_0, window_bounds = array<i64: 1, 4, 256>}, {pipeline_mode = #tpu.pipeline_mode<synchronous>, transform_indices = @transform_1, window_bounds = array<i64: 8, 4>}, {pipeline_mode = #tpu.pipeline_mode<synchronous>, transform_indices = @transform_2, window_bounds = array<i64: 8, 1>}, {transform_indices = @transform_3, window_bounds = array<i64: 1, 8, 256>}]} {
    %c0 = arith.constant 0 : index
    %c0_0 = arith.constant 0 : index
    %c0_1 = arith.constant 0 : index
    %0 = vector.load %arg2[%c0, %c0_0, %c0_1] : memref<1x4x256xf32, #tpu.memory_space<vmem>>, vector<1x4x256xf32>
    %1 = vector.shape_cast %0 : vector<1x4x256xf32> to vector<4x256xf32>
    %2 = arith.truncf %1 : vector<4x256xf32> to vector<4x256xbf16>
    %c0_2 = arith.constant 0 : index
    %c0_3 = arith.constant 0 : index
    %3 = vector.load %arg3[%c0_2, %c0_3] : memref<8x4xbf16, #tpu.memory_space<vmem>>, vector<8x4xbf16>
    %cst = arith.constant dense<0.000000e+00> : vector<8x256xf32>
    %4 = tpu.matmul %3, %2, %cst {dimension_numbers = #tpu.dot_dimension_numbers<[1], [0], [0], [1], [0, 0, 1, 1], [], []>} : vector<8x4xbf16>, vector<4x256xbf16>, vector<8x256xf32> -> vector<8x256xf32>
    %c0_4 = arith.constant 0 : index
    %c0_5 = arith.constant 0 : index
    %5 = vector.load %arg4[%c0_4, %c0_5] : memref<8x1xf32, #tpu.memory_space<vmem>>, vector<8x1xf32>
    %6 = vector.broadcast %5 : vector<8x1xf32> to vector<8x256xf32>
    %7 = arith.addf %4, %6 : vector<8x256xf32>
    %cst_6 = arith.constant 0.000000e+00 : f32
    %8 = vector.broadcast %cst_6 : f32 to vector<8x256xf32>
    %9 = arith.maximumf %7, %8 : vector<8x256xf32>
    %c0_7 = arith.constant 0 : index
    %c0_8 = arith.constant 0 : index
    %c0_9 = arith.constant 0 : index
    %10 = vector.load %arg5[%c0_7, %c0_8, %c0_9] : memref<1x8x256xf32, #tpu.memory_space<vmem>>, vector<1x8x256xf32>
    %11 = vector.shape_cast %10 : vector<1x8x256xf32> to vector<8x256xf32>
    %12 = vector.shape_cast %9 : vector<8x256xf32> to vector<1x8x256xf32>
    tpu.vector_store %arg5[%c0_7, %c0_8, %c0_9], %12 {strides = array<i32>} : memref<1x8x256xf32, #tpu.memory_space<vmem>>, vector<1x8x256xf32>,
    return
  }
  func.func @transform_0(%arg0: i32, %arg1: i32) -> (i32, i32, i32) {
    %c0_i32 = arith.constant 0 : i32
    %c0_i32_0 = arith.constant 0 : i32
    return %arg0, %c0_i32, %arg1 : i32, i32, i32
  }
  func.func @transform_1(%arg0: i32, %arg1: i32) -> (i32, i32) {
    %c0_i32 = arith.constant 0 : i32
    %c0_i32_0 = arith.constant 0 : i32
    %c0_i32_1 = arith.constant 0 : i32
    return %c0_i32, %c0_i32_0 : i32, i32
  }
  func.func @transform_2(%arg0: i32, %arg1: i32) -> (i32, i32) {
    %c0_i32 = arith.constant 0 : i32
    %c0_i32_0 = arith.constant 0 : i32
    %c0_i32_1 = arith.constant 0 : i32
    return %c0_i32, %c0_i32_0 : i32, i32
  }
  func.func @transform_3(%arg0: i32, %arg1: i32) -> (i32, i32, i32) {
    %c0_i32 = arith.constant 0 : i32
    %c0_i32_0 = arith.constant 0 : i32
    return %arg0, %c0_i32, %arg1 : i32, i32, i32
  }
}

</mosaic_0001>

<llo_original>
// kernel: tpu_custom_call.1
$region0: #{tpu_custom_call.1}
  #allocation0 [shape = 'u32[]', space=smem, size = 0x4, offset = 0x4, fixed_abs, tag = 'smem constant byte address 0x4 - core index']
  #allocation1 [shape = 'u32[72,128]{1,0:T(1,128)}', space=vmem, size = 0x9000, scoped, tag = 'internal scratch']
  %s0 = inlined_call_operand.hbm [shape: f32[2,4,256], index: 0, kind: input, shape index: {}]
  %s1 = inlined_call_operand.vmem [shape: bf16[8,4], index: 1, kind: input, shape index: {}]
  %s2 = inlined_call_operand.vmem [shape: f32[8,1], index: 2, kind: input, shape index: {}]
  %s3 = inlined_call_operand.hbm [shape: f32[2,8,256], index: 3, kind: output, shape index: {}]
  %s4 = sld [smem:[#allocation0]]
  $region49: #{tpu_custom_call.1} parent=0
    _
  %s6 = ssub.s32 1, %s4
  %s7 = scalar_select 0, %s6, %s4
  $region1: #{tpu_custom_call.1} parent=0
    #allocation2 [shape = 'u8[8192]{0}', space=vmem, size = 0x2000, scoped, tag = 'input window, operand 0']
    #allocation3 [shape = 's32[2]{0}', space=sflag, size = 0x8, scoped, tag = 'scoped memory for tpu_custom_call.1']
    #allocation4 [shape = 's32[2]{0}', space=sflag, size = 0x8, scoped, tag = 'scoped memory for tpu_custom_call.1']
    #allocation5 [shape = 'u8[16384]{0}', space=vmem, size = 0x4000, scoped, tag = 'output window, operand 0']
    %8 = vsyncpa [#allocation3], 0
    %s9 = scalar_lea.sflag [#allocation3], 1
    %10 = vsyncpa %s9, 0
    %11 = vsyncpa [#allocation4], 0
    %s12 = scalar_lea.sflag [#allocation4], 1
    %13 = vsyncpa %s12, 0
    loop: start=0, step=1, limit=4
    $region2: #{tpu_custom_call.1} parent=1 // loop_pre_header
      _
    $region3: #{tpu_custom_call.1} parent=1 // loop_header
      %s15 = sphi 0, %s19
      %p16 = scmp.ge.s32.totalorder %s15, 4
      %s22 = sphi 0, %s34
      %s23 = sphi 0, %s30
      %s24 = sphi 0, %s22
      %s25 = sphi 0, %s23
      %s26 = sphi 0, %s24
      %s27 = sphi 0, %s25
      %s39 = sphi 0, %s41
      %s42 = sphi 0, %s39
      %s43 = sphi 0, %s42
      %s59 = sphi 0, %s43
      %s63 = sphi 0, %s63
      %s65 = sphi 0, %s63
      %s66 = sphi 0, %s65
      %s80 = sphi 0, %s66
      %s84 = sphi 0, %s84
      %s86 = sphi 0, %s84
      %s87 = sphi 0, %s86
      %s101 = sphi 0, %s87
      %s109 = sphi 0, %s111
      %s112 = sphi 0, %s109
      %s113 = sphi 0, %s112
      %s129 = sphi 0, %s113
    $region4: #{tpu_custom_call.1} parent=1 // loop_header_branch
      %18 = sbr.rel (%p16) target = $region8
    $region5: #{tpu_custom_call.1} parent=1 // loop_body
      %s20 = ssub.s32 %s15, 1
      %s21 = ssub.s32 %s15, 2
      %s28 = sadd.s32 1, %s23
      %p29 = scmp.ge.s32.totalorder %s28, 1
      %s30 = scalar_select %p29, 0, %s28
      %s31 = sadd.s32 1, %s22
      %s32 = scalar_select %p29, %s31, %s22
      %p33 = scmp.ge.s32.totalorder %s32, 2
      %s34 = scalar_select %p33, 0, %s32
      %s35 = ssub.s32 %s22, %s34
      %s36 = ssub.s32 %s23, %s30
      %s37 = sor.u32 %s35, %s36
      %p38 = scmp.eq.s32.totalorder %s37, 0
      %s40 = sadd.s32 %s39, 1
      %s41 = scalar_select %p38, %s39, %s40
      %p44 = pneg %p38
      %p45 = scmp.eq.s32.totalorder %s15, 1
      %p46 = por %p44, %p45
      %p47 = scmp.ne.s32.totalorder %s39, %s42
      %p48 = scmp.eq.s32.totalorder %s15, 0
      %p49 = por %p47, %p48
      %p50 = scmp.ne.s32.totalorder %s39, %s42
      %p51 = scmp.eq.s32.totalorder %s20, 1
      %p52 = por %p50, %p51
      %p53 = scmp.ne.s32.totalorder %s42, %s43
      %p54 = scmp.eq.s32.totalorder %s20, 0
      %p55 = por %p53, %p54
      %p56 = scmp.ne.s32.totalorder %s42, %s43
      %p57 = scmp.eq.s32.totalorder %s21, 1
      %p58 = por %p56, %p57
      %p60 = scmp.ne.s32.totalorder %s43, %s59
      %p61 = scmp.eq.s32.totalorder %s21, 0
      %p62 = por %p60, %p61
      %s64 = sadd.s32 %s63, 1
      %p67 = scmp.eq.s32.totalorder %s15, 1
      %p68 = scmp.ne.s32.totalorder %s63, %s65
      %p69 = scmp.eq.s32.totalorder %s15, 0
      %p70 = por %p68, %p69
      %p71 = scmp.ne.s32.totalorder %s63, %s65
      %p72 = scmp.eq.s32.totalorder %s20, 1
      %p73 = por %p71, %p72
      %p74 = scmp.ne.s32.totalorder %s65, %s66
      %p75 = scmp.eq.s32.totalorder %s20, 0
      %p76 = por %p74, %p75
      %p77 = scmp.ne.s32.totalorder %s65, %s66
      %p78 = scmp.eq.s32.totalorder %s21, 1
      %p79 = por %p77, %p78
      %p81 = scmp.ne.s32.totalorder %s66, %s80
      %p82 = scmp.eq.s32.totalorder %s21, 0
      %p83 = por %p81, %p82
      %s85 = sadd.s32 %s84, 1
      %p88 = scmp.eq.s32.totalorder %s15, 1
      %p89 = scmp.ne.s32.totalorder %s84, %s86
      %p90 = scmp.eq.s32.totalorder %s15, 0
      %p91 = por %p89, %p90
      %p92 = scmp.ne.s32.totalorder %s84, %s86
      %p93 = scmp.eq.s32.totalorder %s20, 1
      %p94 = por %p92, %p93
      %p95 = scmp.ne.s32.totalorder %s86, %s87
      %p96 = scmp.eq.s32.totalorder %s20, 0
      %p97 = por %p95, %p96
      %p98 = scmp.ne.s32.totalorder %s86, %s87
      %p99 = scmp.eq.s32.totalorder %s21, 1
      %p100 = por %p98, %p99
      %p102 = scmp.ne.s32.totalorder %s87, %s101
      %p103 = scmp.eq.s32.totalorder %s21, 0
      %p104 = por %p102, %p103
      %s105 = ssub.s32 %s22, %s34
      %s106 = ssub.s32 %s23, %s30
      %s107 = sor.u32 %s105, %s106
      %p108 = scmp.eq.s32.totalorder %s107, 0
      %s110 = sadd.s32 %s109, 1
      %s111 = scalar_select %p108, %s109, %s110
      %p114 = pneg %p108
      %p115 = scmp.eq.s32.totalorder %s15, 1
      %p116 = por %p114, %p115
      %p117 = scmp.ne.s32.totalorder %s109, %s112
      %p118 = scmp.eq.s32.totalorder %s15, 0
      %p119 = por %p117, %p118
      %p120 = scmp.ne.s32.totalorder %s109, %s112
      %p121 = scmp.eq.s32.totalorder %s20, 1
      %p122 = por %p120, %p121
      %p123 = scmp.ne.s32.totalorder %s112, %s113
      %p124 = scmp.eq.s32.totalorder %s20, 0
      %p125 = por %p123, %p124
      %p126 = scmp.ne.s32.totalorder %s112, %s113
      %p127 = scmp.eq.s32.totalorder %s21, 1
      %p128 = por %p126, %p127
      %p130 = scmp.ne.s32.totalorder %s113, %s129
      %p131 = scmp.eq.s32.totalorder %s21, 0
      %p132 = por %p130, %p131
      %p133 = scmp.le.s32.totalorder 1, %s15
      %p134 = scmp.lt.s32.totalorder %s15, 3
      %p135 = pnand %p133, %p134
      %p136 = pneg %p135
      // Predicated region
      $region9: #{tpu_custom_call.1} parent=5 // pred_check
        _
      $region10: #{tpu_custom_call.1} parent=5 // pred_check_branch
        %138 = sbr.rel (%p135) target = $region12
      $region11: #{tpu_custom_call.1} parent=5 // pred_region
        %s139 = ssub.s32 %s15, 1
        // Predicated region
        $region13: #{tpu_custom_call.1} parent=11 // pred_check
          %p140 = pneg %p76
        $region14: #{tpu_custom_call.1} parent=11 // pred_check_branch
          %142 = sbr.rel (%p140) target = $region16
        $region15: #{tpu_custom_call.1} parent=11 // pred_region
          _
        $region16: #{tpu_custom_call.1} parent=11 // pred_fallthru
          _
        // Predicated region
        $region17: #{tpu_custom_call.1} parent=11 // pred_check
          %p143 = pneg %p97
        $region18: #{tpu_custom_call.1} parent=11 // pred_check_branch
          %145 = sbr.rel (%p143) target = $region20
        $region19: #{tpu_custom_call.1} parent=11 // pred_region
          _
        $region20: #{tpu_custom_call.1} parent=11 // pred_fallthru
          _
      $region12: #{tpu_custom_call.1} parent=5 // pred_fallthru
        _
      %p146 = scmp.lt.s32.totalorder %s15, 2
      // Predicated region
      $region21: #{tpu_custom_call.1} parent=5 // pred_check
        %p147 = pneg %p146
      $region22: #{tpu_custom_call.1} parent=5 // pred_check_branch
        %149 = sbr.rel (%p147) target = $region24
      $region23: #{tpu_custom_call.1} parent=5 // pred_region
        // Predicated region
        $region25: #{tpu_custom_call.1} parent=23 // pred_check
          %p150 = pneg %p49
        $region26: #{tpu_custom_call.1} parent=23 // pred_check_branch
          %152 = sbr.rel (%p150) target = $region28
        $region27: #{tpu_custom_call.1} parent=23 // pred_region
          %s153 = sand.u32 %s39, 1
          %s154 = scalar_lea.sflag [#allocation3], %s153
          %s155 = sand.u32 %s39, 1
          %s156 = smul.addr %s155, 8
          %s157 = scalar_lea.vmem [#allocation2], %s156
          %s158 = smul.u32 2, %s23
          %160 = vsyncadd %s154, 0
          %s161 = smul.addr %s22, 2
          %s162 = sadd.s32 %s158, %s161
          %s163 = smul.addr %s162, 4
          %s164 = scalar_lea.hbm %s0, %s163
          %s166 = sshll.u32 %s164, 4
          %s167 = int_to_ptr.hbm [resolvable:$true] %s166
          %s168 = sshll.u32 %s157, 4
          %s169 = int_to_ptr.vmem [resolvable:$true] %s168
          %171 = dma.hbm_to_vmem [thread:$0]  %s167, 128, %s169, %s154
        $region28: #{tpu_custom_call.1} parent=23 // pred_fallthru
          _
      $region24: #{tpu_custom_call.1} parent=5 // pred_fallthru
        _
      %p172 = scmp.le.s32.totalorder 1, %s15
      %p173 = scmp.lt.s32.totalorder %s15, 3
      %p174 = pnand %p172, %p173
      %p175 = pneg %p174
      // Predicated region
      $region29: #{tpu_custom_call.1} parent=5 // pred_check
        _
      $region30: #{tpu_custom_call.1} parent=5 // pred_check_branch
        %177 = sbr.rel (%p174) target = $region32
      $region31: #{tpu_custom_call.1} parent=5 // pred_region
        %s178 = ssub.s32 %s15, 1
        %s179 = sand.u32 %s42, 1
        %s180 = scalar_lea.sflag [#allocation3], %s179
        %s181 = sand.u32 %s42, 1
        %s182 = smul.addr %s181, 8
        %s183 = scalar_lea.vmem [#allocation2], %s182
        // Predicated region
        $region33: #{tpu_custom_call.1} parent=31 // pred_check
          %p184 = pneg %p55
        $region34: #{tpu_custom_call.1} parent=31 // pred_check_branch
          %186 = sbr.rel (%p184) target = $region36
        $region35: #{tpu_custom_call.1} parent=31 // pred_region
          %188 = dma.done %s180, 128
        $region36: #{tpu_custom_call.1} parent=31 // pred_fallthru
          _
        %s189 = sand.u32 %s42, 1
        %s190 = scalar_lea.sflag [#allocation3], %s189
        %s191 = sand.u32 %s42, 1
        %s192 = smul.addr %s191, 8
        %s193 = scalar_lea.vmem [#allocation2], %s192
        %p194 = pneg %p55
        %p195 = pneg %p52
        %p196 = pneg %p76
        %p197 = pneg %p73
        %p198 = pneg %p97
        %p199 = pneg %p94
        %p200 = pneg %p125
        %p201 = pneg %p122
        %s202 = sand.u32 %s112, 1
        %s203 = scalar_lea.sflag [#allocation4], %s202
        %s204 = sand.u32 %s112, 1
        %s205 = smul.addr %s204, 16
        %s206 = scalar_lea.vmem [#allocation5], %s205
        %s207 = smul.u32 2, %s25
        %s208 = smul.u32 2, %s25
        %v210 = vld [vmem:[%s183] sm:$0xff]
        %212 = vst [vmem:[#allocation1] ss:$2 sm:$0xff] %v210
        %v213 = vld.sshfl [vmem:[#allocation1] sm:$0xff pattern:$0x75316420]
        %v214 = vld.sshfl [vmem:[#allocation1 + $0x8] sm:$0xff pattern:$0x75316420]
        %v217 = vpack.c.bf16 %v213, %v213
        %v218 = vpack.c.bf16 %v214, %v214
        %v219 = vld [vmem:[%s1] sm:$0xf]
        %v220 = vld [vmem:[%s2] sm:$0xff]
        %222 = vset.pattern.permute.xlu0 0
        %223 = vperm.xlu0 %222, %v220
        %v224 = vpop.permute.xlu0 %223
        %vm226 = vcmask 31744
        %v228 = vsel %vm226, %v219, 0
        %vm230 = vcmask 1041408
        %v232 = vsel %vm230, %v217, 0
        %v235 = vsel %vm230, %v218, 0
        %237 = vmatpush.bf16.msra.mxu0 0
        %238 = vmatpush.bf16.msra.mxu0 0
        %239 = vmatpush.bf16.msra.mxu0 0
        %240 = vmatpush.bf16.msra.mxu0 0
        %241 = vmatpush.bf16.msra.mxu0 0
        %242 = vmatpush.bf16.msra.mxu0 0
        %243 = vmatpush.bf16.msra.mxu0 0
        %244 = vmatpush.bf16.msra.mxu0 %v232
        %245 = vmatmul.bf16.gmra.mxu0 %v228
        %v246 = vpop.f32.mrf.mxu0
        %v247 = vadd.f32 %v224, %v246
        %v248 = vpop.f32.mrf.mxu0
        %249 = vdwg.mxu0
        %250 = vmatpush.bf16.msra.mxu0 0
        %251 = vmatpush.bf16.msra.mxu0 0
        %252 = vmatpush.bf16.msra.mxu0 0
        %253 = vmatpush.bf16.msra.mxu0 0
        %254 = vmatpush.bf16.msra.mxu0 0
        %255 = vmatpush.bf16.msra.mxu0 0
        %256 = vmatpush.bf16.msra.mxu0 0
        %257 = vmatpush.bf16.msra.mxu0 %v235
        %258 = vmatmul.bf16.gmra.mxu0 %v228
        %v259 = vpop.f32.mrf.mxu0
        %v260 = vadd.f32 %v224, %v259
        %v261 = vpop.f32.mrf.mxu0
        %262 = vdwg.mxu0
        %v263 = vmax.f32 %v247, 0.0
        %v264 = vmax.f32 %v260, 0.0
        %265 = vst [vmem:[%s206] sm:$0xff] %v263
        %266 = vst [vmem:[%s206 + $0x8] sm:$0xff] %v264
        %s267 = sand.u32 %s112, 1
        %s268 = scalar_lea.sflag [#allocation4], %s267
        %s269 = sand.u32 %s112, 1
        %s270 = smul.addr %s269, 16
        %s271 = scalar_lea.vmem [#allocation5], %s270
        // Predicated region
        $region37: #{tpu_custom_call.1} parent=31 // pred_check
          %p272 = pneg %p122
        $region38: #{tpu_custom_call.1} parent=31 // pred_check_branch
          %274 = sbr.rel (%p272) target = $region40
        $region39: #{tpu_custom_call.1} parent=31 // pred_region
          %s275 = smul.u32 2, %s25
          %277 = vsyncadd %s268, 0
          %s278 = smul.addr %s24, 2
          %s279 = sadd.s32 %s275, %s278
          %s280 = smul.addr %s279, 8
          %s281 = scalar_lea.hbm %s3, %s280
          %s283 = sshll.u32 %s271, 4
          %s284 = int_to_ptr.vmem [resolvable:$true] %s283
          %s285 = sshll.u32 %s281, 4
          %s286 = int_to_ptr.hbm [resolvable:$true] %s285
          %288 = dma.vmem_to_hbm [thread:$0]  %s284, 256, %s286, %s268
        $region40: #{tpu_custom_call.1} parent=31 // pred_fallthru
          _
      $region32: #{tpu_custom_call.1} parent=5 // pred_fallthru
        _
      %p289 = scmp.le.s32.totalorder 2, %s15
      // Predicated region
      $region41: #{tpu_custom_call.1} parent=5 // pred_check
        %p290 = pneg %p289
      $region42: #{tpu_custom_call.1} parent=5 // pred_check_branch
        %292 = sbr.rel (%p290) target = $region44
      $region43: #{tpu_custom_call.1} parent=5 // pred_region
        %s293 = ssub.s32 %s15, 2
        // Predicated region
        $region45: #{tpu_custom_call.1} parent=43 // pred_check
          %p294 = pneg %p128
        $region46: #{tpu_custom_call.1} parent=43 // pred_check_branch
          %296 = sbr.rel (%p294) target = $region48
        $region47: #{tpu_custom_call.1} parent=43 // pred_region
          %s297 = sand.u32 %s113, 1
          %s298 = scalar_lea.sflag [#allocation4], %s297
          %s299 = sand.u32 %s113, 1
          %s300 = smul.addr %s299, 16
          %s301 = scalar_lea.vmem [#allocation5], %s300
          %303 = dma.done %s298, 256
        $region48: #{tpu_custom_call.1} parent=43 // pred_fallthru
          _
      $region44: #{tpu_custom_call.1} parent=5 // pred_fallthru
        _
    $region6: #{tpu_custom_call.1} parent=1 // loop_footer
      %s19 = sadd.s32 1, %s15
    $region7: #{tpu_custom_call.1} parent=1 // loop_footer_branch
      %14 = sbr.rel target = $region3
    $region8: #{tpu_custom_call.1} parent=1 // loop_exit
      _
    %304 = vsyncpa [#allocation3], 1
    %s305 = scalar_lea.sflag [#allocation3], 1
    %306 = vsyncpa %s305, 1
    %307 = vsyncpa [#allocation4], 1
    %s308 = scalar_lea.sflag [#allocation4], 1
    %309 = vsyncpa %s308, 1

</llo_original>
